<compile_context>
chip_gen: v7x
topology: tpu7x:2x2x1
jax: 0.10.0
libtpu: 0.0.40
codegen_flags: <defaults>
</compile_context>

<pallas_src>
import jax
import jax.numpy as jnp
from jax.experimental import pallas as pl
from jax.experimental.pallas import tpu as pltpu


def _round_up(x, m):
    return ((x + m - 1) // m) * m


def rnn_kernel(x_ref, wih_t_ref, whh_t_ref, b_ref, wfc_t_ref, bfc_ref,
               out_ref, pre_ref, h_ref):
    # x_ref:    (seq_len, B_TILE, E_pad)   embedded inputs for this batch tile
    # wih_t_ref:(E_pad, H_pad)             W_ih^T (zero padded)
    # whh_t_ref:(H_pad, H_pad)             W_hh^T (zero padded)
    # b_ref:    (1, H_pad)                 b_ih + b_hh (zero padded)
    # wfc_t_ref:(H_pad, O_pad)             W_fc^T (zero padded)
    # bfc_ref:  (1, O_pad)                 b_fc (zero padded)
    # out_ref:  (B_TILE, O_pad)            fc(final hidden), lane-dense
    # pre_ref:  (seq_len, B_TILE, H_pad)   precomputed input projections (scratch)
    # h_ref:    (B_TILE, H_pad)            hidden state carried across time (scratch)
    seq_len, b_tile, e_pad = x_ref.shape
    h_pad = h_ref.shape[-1]

    # ---- Phase 1: input projection for ALL timesteps in one MXU call. ------
    # (no loop-carried dependence: X @ W_ih^T + b done once, bias broadcast once)
    x_flat = x_ref[...].reshape(seq_len * b_tile, e_pad)
    pre = (jnp.dot(x_flat, wih_t_ref[...], preferred_element_type=jnp.float32)
           + b_ref[...])
    pre_ref[...] = pre.reshape(seq_len, b_tile, h_pad)

    # ---- Phase 2: sequential recurrence (only h @ W_hh^T + tanh serial). ---
    h_ref[...] = jnp.zeros_like(h_ref)
    whh_t = whh_t_ref[...]

    def step(t, carry):
        pre_t = pre_ref[t]                                   # (B_TILE, H_pad)
        h_ref[...] = jnp.tanh(
            pre_t + jnp.dot(h_ref[...], whh_t,
                            preferred_element_type=jnp.float32))
        return carry

    jax.lax.fori_loop(0, seq_len, step, 0,
                      unroll=True if seq_len <= 32 else False)

    # ---- Phase 3: fc on the final hidden state (lane-dense padded store). --
    out_ref[...] = (
        jnp.dot(h_ref[...], wfc_t_ref[...], preferred_element_type=jnp.float32)
        + bfc_ref[...]
    ).astype(out_ref.dtype)


def rnn_forward(text, text_lengths, params):
    # text_lengths is ignored by the reference forward (signature only).
    del text_lengths
    emb_w = params["embedding_weight"]        # (vocab, emb_dim)
    w_ih = params["rnn_weight_ih"]            # (hidden, emb_dim)
    w_hh = params["rnn_weight_hh"]            # (hidden, hidden)
    b_ih = params["rnn_bias_ih"]              # (hidden,)
    b_hh = params["rnn_bias_hh"]              # (hidden,)
    w_fc = params["fc_weight"]                # (out_dim, hidden)
    b_fc = params["fc_bias"]                  # (out_dim,)

    seq_len, batch = text.shape
    emb_dim = emb_w.shape[1]
    hidden_dim = w_hh.shape[0]
    out_dim = w_fc.shape[0]

    # Pad to full-vreg shapes: sublane granule 8 for batch, lane granule 128
    # for emb / hidden / out. Zero padding is exact (tanh(0)=0, 0-rows/cols
    # contribute nothing), so results are sliced back unchanged.
    B_TILE = 8
    b_pad = _round_up(max(batch, B_TILE), B_TILE)
    e_pad = _round_up(emb_dim, 128)
    h_pad = _round_up(hidden_dim, 128)
    o_pad = _round_up(out_dim, 128)
    num_b_tiles = b_pad // B_TILE

    # Glue: embedding gather + zero-pad + weight pre-transposition.
    embedded = jnp.take(emb_w, text, axis=0)                     # (seq, batch, emb)
    embedded = jnp.pad(embedded,
                       ((0, 0), (0, b_pad - batch), (0, e_pad - emb_dim)))
    wih_t = jnp.pad(w_ih.T, ((0, e_pad - emb_dim), (0, h_pad - hidden_dim)))
    whh_t = jnp.pad(w_hh.T, ((0, h_pad - hidden_dim), (0, h_pad - hidden_dim)))
    b = jnp.pad(b_ih + b_hh, (0, h_pad - hidden_dim)).reshape(1, h_pad)
    wfc_t = jnp.pad(w_fc.T, ((0, h_pad - hidden_dim), (0, o_pad - out_dim)))
    bfc = jnp.pad(b_fc, (0, o_pad - out_dim)).reshape(1, o_pad)

    grid_spec = pltpu.PrefetchScalarGridSpec(
        num_scalar_prefetch=0,
        grid=(num_b_tiles,),                                     # parallel over batch tiles
        in_specs=[
            pl.BlockSpec((seq_len, B_TILE, e_pad), lambda i: (0, i, 0)),  # embedded slab
            pl.BlockSpec((e_pad, h_pad), lambda i: (0, 0)),               # W_ih^T
            pl.BlockSpec((h_pad, h_pad), lambda i: (0, 0)),               # W_hh^T
            pl.BlockSpec((1, h_pad), lambda i: (0, 0)),                   # b_ih + b_hh
            pl.BlockSpec((h_pad, o_pad), lambda i: (0, 0)),               # W_fc^T
            pl.BlockSpec((1, o_pad), lambda i: (0, 0)),                   # b_fc
        ],
        out_specs=pl.BlockSpec((B_TILE, o_pad), lambda i: (i, 0)),
        scratch_shapes=[
            pltpu.VMEM((seq_len, B_TILE, h_pad), jnp.float32),   # precomputed X @ W_ih^T + b
            pltpu.VMEM((B_TILE, h_pad), jnp.float32),            # hidden state
        ],
    )

    out_padded = pl.pallas_call(
        rnn_kernel,
        out_shape=jax.ShapeDtypeStruct((b_pad, o_pad), jnp.float32),
        grid_spec=grid_spec,
        compiler_params=pltpu.CompilerParams(
            dimension_semantics=("parallel",)),
    )(embedded, wih_t, whh_t, b, wfc_t, bfc)

    return out_padded[:batch, :out_dim]


def rnn_reference(text, text_lengths, params):
    """Pure-JAX reference matching PyTorch semantics."""
    del text_lengths
    emb = jnp.take(params["embedding_weight"], text, axis=0)     # (seq, batch, emb)
    w_ih, w_hh = params["rnn_weight_ih"], params["rnn_weight_hh"]
    b = params["rnn_bias_ih"] + params["rnn_bias_hh"]

    def step(h, x_t):
        h_new = jnp.tanh(x_t @ w_ih.T + h @ w_hh.T + b)
        return h_new, None

    h0 = jnp.zeros((text.shape[1], w_hh.shape[0]), jnp.float32)
    h_final, _ = jax.lax.scan(step, h0, emb)
    return h_final @ params["fc_weight"].T + params["fc_bias"]


def make_params(key, input_dim, embedding_dim, hidden_dim, output_dim):
    ks = jax.random.split(key, 7)

    def u(k, shape, scale):
        return jax.random.uniform(k, shape, jnp.float32, -scale, scale)

    s_rnn = 1.0 / jnp.sqrt(hidden_dim)
    s_fc = 1.0 / jnp.sqrt(hidden_dim)
    return {
        "embedding_weight": jax.random.normal(ks[0], (input_dim, embedding_dim), jnp.float32),
        "rnn_weight_ih": u(ks[1], (hidden_dim, embedding_dim), s_rnn),
        "rnn_weight_hh": u(ks[2], (hidden_dim, hidden_dim), s_rnn),
        "rnn_bias_ih": u(ks[3], (hidden_dim,), s_rnn),
        "rnn_bias_hh": u(ks[4], (hidden_dim,), s_rnn),
        "fc_weight": u(ks[5], (output_dim, hidden_dim), s_fc),
        "fc_bias": u(ks[6], (output_dim,), s_fc),
    }


if __name__ == "__main__":
    input_dim, embedding_dim, hidden_dim, output_dim = 16, 32, 32, 4
    seq_len, batch = 8, 2

    key = jax.random.PRNGKey(0)
    k_text, k_params = jax.random.split(key)
    text = jax.random.randint(k_text, (seq_len, batch), 0, input_dim, dtype=jnp.int32)
    text_lengths = jnp.full((batch,), seq_len, dtype=jnp.int32)
    params = make_params(k_params, input_dim, embedding_dim, hidden_dim, output_dim)

    out = rnn_forward(text, text_lengths, params)
    out = jax.block_until_ready(out)

    ref = rnn_reference(text, text_lengths, params)
    assert out.shape == (batch, output_dim)
    assert jnp.allclose(out, ref, atol=1e-5, rtol=1e-5), "mismatch vs reference"

    print("KERNEL_OK")
</pallas_src>

<mosaic_0001>
module attributes {stable_mosaic.version = 11 : i64} {
  func.func @rnn_kernel(%arg0: i32, %arg1: memref<8x8x128xf32, #tpu.memory_space<vmem>>, %arg2: memref<128x128xf32, #tpu.memory_space<vmem>>, %arg3: memref<128x128xf32, #tpu.memory_space<vmem>>, %arg4: memref<1x128xf32, #tpu.memory_space<vmem>>, %arg5: memref<128x128xf32, #tpu.memory_space<vmem>>, %arg6: memref<1x128xf32, #tpu.memory_space<vmem>>, %arg7: memref<8x128xf32, #tpu.memory_space<vmem>>, %arg8: memref<8x8x128xf32, #tpu.memory_space<vmem>>, %arg9: memref<8x128xf32, #tpu.memory_space<vmem>>) attributes {dimension_semantics = [#tpu.dimension_semantics<parallel>], iteration_bounds = array<i64: 1>, scalar_prefetch = 0 : i64, scratch_operands = 2 : i64, tpu.core_type = #tpu.core_type<tc>, window_params = [{transform_indices = @transform_0, window_bounds = array<i64: 8, 8, 128>}, {pipeline_mode = #tpu.pipeline_mode<synchronous>, transform_indices = @transform_1, window_bounds = array<i64: 128, 128>}, {pipeline_mode = #tpu.pipeline_mode<synchronous>, transform_indices = @transform_2, window_bounds = array<i64: 128, 128>}, {pipeline_mode = #tpu.pipeline_mode<synchronous>, transform_indices = @transform_3, window_bounds = array<i64: 1, 128>}, {pipeline_mode = #tpu.pipeline_mode<synchronous>, transform_indices = @transform_4, window_bounds = array<i64: 128, 128>}, {pipeline_mode = #tpu.pipeline_mode<synchronous>, transform_indices = @transform_5, window_bounds = array<i64: 1, 128>}, {transform_indices = @transform_6, window_bounds = array<i64: 8, 128>}]} {
    %c0 = arith.constant 0 : index
    %c0_0 = arith.constant 0 : index
    %c0_1 = arith.constant 0 : index
    %0 = vector.load %arg1[%c0, %c0_0, %c0_1] : memref<8x8x128xf32, #tpu.memory_space<vmem>>, vector<8x8x128xf32>
    %1 = vector.shape_cast %0 : vector<8x8x128xf32> to vector<64x128xf32>
    %c0_2 = arith.constant 0 : index
    %c0_3 = arith.constant 0 : index
    %2 = vector.load %arg2[%c0_2, %c0_3] : memref<128x128xf32, #tpu.memory_space<vmem>>, vector<128x128xf32>
    %cst = arith.constant dense<0.000000e+00> : vector<64x128xf32>
    %3 = tpu.matmul %1, %2, %cst {dimension_numbers = #tpu.dot_dimension_numbers<[1], [0], [0], [1], [0, 0, 1, 1], [], []>} : vector<64x128xf32>, vector<128x128xf32>, vector<64x128xf32> -> vector<64x128xf32>
    %c0_4 = arith.constant 0 : index
    %c0_5 = arith.constant 0 : index
    %4 = vector.load %arg4[%c0_4, %c0_5] : memref<1x128xf32, #tpu.memory_space<vmem>>, vector<1x128xf32>
    %5 = vector.broadcast %4 : vector<1x128xf32> to vector<64x128xf32>
    %6 = arith.addf %3, %5 : vector<64x128xf32>
    %7 = vector.shape_cast %6 : vector<64x128xf32> to vector<8x8x128xf32>
    %c0_6 = arith.constant 0 : index
    %c0_7 = arith.constant 0 : index
    %c0_8 = arith.constant 0 : index
    %8 = vector.load %arg8[%c0_6, %c0_7, %c0_8] : memref<8x8x128xf32, #tpu.memory_space<vmem>>, vector<8x8x128xf32>
    tpu.vector_store %arg8[%c0_6, %c0_7, %c0_8], %7 {strides = array<i32>} : memref<8x8x128xf32, #tpu.memory_space<vmem>>, vector<8x8x128xf32>,
    %cst_9 = arith.constant 0.000000e+00 : f32
    %9 = vector.broadcast %cst_9 : f32 to vector<8x128xf32>
    %c0_10 = arith.constant 0 : index
    %c0_11 = arith.constant 0 : index
    %10 = vector.load %arg9[%c0_10, %c0_11] : memref<8x128xf32, #tpu.memory_space<vmem>>, vector<8x128xf32>
    tpu.vector_store %arg9[%c0_10, %c0_11], %9 {strides = array<i32>} : memref<8x128xf32, #tpu.memory_space<vmem>>, vector<8x128xf32>,
    %c0_12 = arith.constant 0 : index
    %c0_13 = arith.constant 0 : index
    %11 = vector.load %arg3[%c0_12, %c0_13] : memref<128x128xf32, #tpu.memory_space<vmem>>, vector<128x128xf32>
    %c0_i32 = arith.constant 0 : i32
    %12 = arith.index_cast %c0_i32 : i32 to index
    %c0_14 = arith.constant 0 : index
    %c0_15 = arith.constant 0 : index
    %13 = vector.load %arg8[%12, %c0_14, %c0_15] : memref<8x8x128xf32, #tpu.memory_space<vmem>>, vector<1x8x128xf32>
    %14 = vector.shape_cast %13 : vector<1x8x128xf32> to vector<8x128xf32>
    %c0_16 = arith.constant 0 : index
    %c0_17 = arith.constant 0 : index
    %15 = vector.load %arg9[%c0_16, %c0_17] : memref<8x128xf32, #tpu.memory_space<vmem>>, vector<8x128xf32>
    %cst_18 = arith.constant dense<0.000000e+00> : vector<8x128xf32>
    %16 = tpu.matmul %15, %11, %cst_18 {dimension_numbers = #tpu.dot_dimension_numbers<[1], [0], [0], [1], [0, 0, 1, 1], [], []>} : vector<8x128xf32>, vector<128x128xf32>, vector<8x128xf32> -> vector<8x128xf32>
    %17 = arith.addf %14, %16 : vector<8x128xf32>
    %18 = math.tanh %17 : vector<8x128xf32>
    %c0_19 = arith.constant 0 : index
    %c0_20 = arith.constant 0 : index
    %19 = vector.load %arg9[%c0_19, %c0_20] : memref<8x128xf32, #tpu.memory_space<vmem>>, vector<8x128xf32>
    tpu.vector_store %arg9[%c0_19, %c0_20], %18 {strides = array<i32>} : memref<8x128xf32, #tpu.memory_space<vmem>>, vector<8x128xf32>,
    %c1_i32 = arith.constant 1 : i32
    %20 = arith.index_cast %c1_i32 : i32 to index
    %c0_21 = arith.constant 0 : index
    %c0_22 = arith.constant 0 : index
    %21 = vector.load %arg8[%20, %c0_21, %c0_22] : memref<8x8x128xf32, #tpu.memory_space<vmem>>, vector<1x8x128xf32>
    %22 = vector.shape_cast %21 : vector<1x8x128xf32> to vector<8x128xf32>
    %c0_23 = arith.constant 0 : index
    %c0_24 = arith.constant 0 : index
    %23 = vector.load %arg9[%c0_23, %c0_24] : memref<8x128xf32, #tpu.memory_space<vmem>>, vector<8x128xf32>
    %cst_25 = arith.constant dense<0.000000e+00> : vector<8x128xf32>
    %24 = tpu.matmul %23, %11, %cst_25 {dimension_numbers = #tpu.dot_dimension_numbers<[1], [0], [0], [1], [0, 0, 1, 1], [], []>} : vector<8x128xf32>, vector<128x128xf32>, vector<8x128xf32> -> vector<8x128xf32>
    %25 = arith.addf %22, %24 : vector<8x128xf32>
    %26 = math.tanh %25 : vector<8x128xf32>
    %c0_26 = arith.constant 0 : index
    %c0_27 = arith.constant 0 : index
    %27 = vector.load %arg9[%c0_26, %c0_27] : memref<8x128xf32, #tpu.memory_space<vmem>>, vector<8x128xf32>
    tpu.vector_store %arg9[%c0_26, %c0_27], %26 {strides = array<i32>} : memref<8x128xf32, #tpu.memory_space<vmem>>, vector<8x128xf32>,
    %c2_i32 = arith.constant 2 : i32
    %28 = arith.index_cast %c2_i32 : i32 to index
    %c0_28 = arith.constant 0 : index
    %c0_29 = arith.constant 0 : index
    %29 = vector.load %arg8[%28, %c0_28, %c0_29] : memref<8x8x128xf32, #tpu.memory_space<vmem>>, vector<1x8x128xf32>
    %30 = vector.shape_cast %29 : vector<1x8x128xf32> to vector<8x128xf32>
    %c0_30 = arith.constant 0 : index
    %c0_31 = arith.constant 0 : index
    %31 = vector.load %arg9[%c0_30, %c0_31] : memref<8x128xf32, #tpu.memory_space<vmem>>, vector<8x128xf32>
    %cst_32 = arith.constant dense<0.000000e+00> : vector<8x128xf32>
    %32 = tpu.matmul %31, %11, %cst_32 {dimension_numbers = #tpu.dot_dimension_numbers<[1], [0], [0], [1], [0, 0, 1, 1], [], []>} : vector<8x128xf32>, vector<128x128xf32>, vector<8x128xf32> -> vector<8x128xf32>
    %33 = arith.addf %30, %32 : vector<8x128xf32>
    %34 = math.tanh %33 : vector<8x128xf32>
    %c0_33 = arith.constant 0 : index
    %c0_34 = arith.constant 0 : index
    %35 = vector.load %arg9[%c0_33, %c0_34] : memref<8x128xf32, #tpu.memory_space<vmem>>, vector<8x128xf32>
    tpu.vector_store %arg9[%c0_33, %c0_34], %34 {strides = array<i32>} : memref<8x128xf32, #tpu.memory_space<vmem>>, vector<8x128xf32>,
    %c3_i32 = arith.constant 3 : i32
    %36 = arith.index_cast %c3_i32 : i32 to index
    %c0_35 = arith.constant 0 : index
    %c0_36 = arith.constant 0 : index
    %37 = vector.load %arg8[%36, %c0_35, %c0_36] : memref<8x8x128xf32, #tpu.memory_space<vmem>>, vector<1x8x128xf32>
    %38 = vector.shape_cast %37 : vector<1x8x128xf32> to vector<8x128xf32>
    %c0_37 = arith.constant 0 : index
    %c0_38 = arith.constant 0 : index
    %39 = vector.load %arg9[%c0_37, %c0_38] : memref<8x128xf32, #tpu.memory_space<vmem>>, vector<8x128xf32>
    %cst_39 = arith.constant dense<0.000000e+00> : vector<8x128xf32>
    %40 = tpu.matmul %39, %11, %cst_39 {dimension_numbers = #tpu.dot_dimension_numbers<[1], [0], [0], [1], [0, 0, 1, 1], [], []>} : vector<8x128xf32>, vector<128x128xf32>, vector<8x128xf32> -> vector<8x128xf32>
    %41 = arith.addf %38, %40 : vector<8x128xf32>
    %42 = math.tanh %41 : vector<8x128xf32>
    %c0_40 = arith.constant 0 : index
    %c0_41 = arith.constant 0 : index
    %43 = vector.load %arg9[%c0_40, %c0_41] : memref<8x128xf32, #tpu.memory_space<vmem>>, vector<8x128xf32>
    tpu.vector_store %arg9[%c0_40, %c0_41], %42 {strides = array<i32>} : memref<8x128xf32, #tpu.memory_space<vmem>>, vector<8x128xf32>,
    %c4_i32 = arith.constant 4 : i32
    %44 = arith.index_cast %c4_i32 : i32 to index
    %c0_42 = arith.constant 0 : index
    %c0_43 = arith.constant 0 : index
    %45 = vector.load %arg8[%44, %c0_42, %c0_43] : memref<8x8x128xf32, #tpu.memory_space<vmem>>, vector<1x8x128xf32>
    %46 = vector.shape_cast %45 : vector<1x8x128xf32> to vector<8x128xf32>
    %c0_44 = arith.constant 0 : index
    %c0_45 = arith.constant 0 : index
    %47 = vector.load %arg9[%c0_44, %c0_45] : memref<8x128xf32, #tpu.memory_space<vmem>>, vector<8x128xf32>
    %cst_46 = arith.constant dense<0.000000e+00> : vector<8x128xf32>
    %48 = tpu.matmul %47, %11, %cst_46 {dimension_numbers = #tpu.dot_dimension_numbers<[1], [0], [0], [1], [0, 0, 1, 1], [], []>} : vector<8x128xf32>, vector<128x128xf32>, vector<8x128xf32> -> vector<8x128xf32>
    %49 = arith.addf %46, %48 : vector<8x128xf32>
    %50 = math.tanh %49 : vector<8x128xf32>
    %c0_47 = arith.constant 0 : index
    %c0_48 = arith.constant 0 : index
    %51 = vector.load %arg9[%c0_47, %c0_48] : memref<8x128xf32, #tpu.memory_space<vmem>>, vector<8x128xf32>
    tpu.vector_store %arg9[%c0_47, %c0_48], %50 {strides = array<i32>} : memref<8x128xf32, #tpu.memory_space<vmem>>, vector<8x128xf32>,
    %c5_i32 = arith.constant 5 : i32
    %52 = arith.index_cast %c5_i32 : i32 to index
    %c0_49 = arith.constant 0 : index
    %c0_50 = arith.constant 0 : index
    %53 = vector.load %arg8[%52, %c0_49, %c0_50] : memref<8x8x128xf32, #tpu.memory_space<vmem>>, vector<1x8x128xf32>
    %54 = vector.shape_cast %53 : vector<1x8x128xf32> to vector<8x128xf32>
    %c0_51 = arith.constant 0 : index
    %c0_52 = arith.constant 0 : index
    %55 = vector.load %arg9[%c0_51, %c0_52] : memref<8x128xf32, #tpu.memory_space<vmem>>, vector<8x128xf32>
    %cst_53 = arith.constant dense<0.000000e+00> : vector<8x128xf32>
    %56 = tpu.matmul %55, %11, %cst_53 {dimension_numbers = #tpu.dot_dimension_numbers<[1], [0], [0], [1], [0, 0, 1, 1], [], []>} : vector<8x128xf32>, vector<128x128xf32>, vector<8x128xf32> -> vector<8x128xf32>
    %57 = arith.addf %54, %56 : vector<8x128xf32>
    %58 = math.tanh %57 : vector<8x128xf32>
    %c0_54 = arith.constant 0 : index
    %c0_55 = arith.constant 0 : index
    %59 = vector.load %arg9[%c0_54, %c0_55] : memref<8x128xf32, #tpu.memory_space<vmem>>, vector<8x128xf32>
    tpu.vector_store %arg9[%c0_54, %c0_55], %58 {strides = array<i32>} : memref<8x128xf32, #tpu.memory_space<vmem>>, vector<8x128xf32>,
    %c6_i32 = arith.constant 6 : i32
    %60 = arith.index_cast %c6_i32 : i32 to index
    %c0_56 = arith.constant 0 : index
    %c0_57 = arith.constant 0 : index
    %61 = vector.load %arg8[%60, %c0_56, %c0_57] : memref<8x8x128xf32, #tpu.memory_space<vmem>>, vector<1x8x128xf32>
    %62 = vector.shape_cast %61 : vector<1x8x128xf32> to vector<8x128xf32>
    %c0_58 = arith.constant 0 : index
    %c0_59 = arith.constant 0 : index
    %63 = vector.load %arg9[%c0_58, %c0_59] : memref<8x128xf32, #tpu.memory_space<vmem>>, vector<8x128xf32>
    %cst_60 = arith.constant dense<0.000000e+00> : vector<8x128xf32>
    %64 = tpu.matmul %63, %11, %cst_60 {dimension_numbers = #tpu.dot_dimension_numbers<[1], [0], [0], [1], [0, 0, 1, 1], [], []>} : vector<8x128xf32>, vector<128x128xf32>, vector<8x128xf32> -> vector<8x128xf32>
    %65 = arith.addf %62, %64 : vector<8x128xf32>
    %66 = math.tanh %65 : vector<8x128xf32>
    %c0_61 = arith.constant 0 : index
    %c0_62 = arith.constant 0 : index
    %67 = vector.load %arg9[%c0_61, %c0_62] : memref<8x128xf32, #tpu.memory_space<vmem>>, vector<8x128xf32>
    tpu.vector_store %arg9[%c0_61, %c0_62], %66 {strides = array<i32>} : memref<8x128xf32, #tpu.memory_space<vmem>>, vector<8x128xf32>,
    %c7_i32 = arith.constant 7 : i32
    %68 = arith.index_cast %c7_i32 : i32 to index
    %c0_63 = arith.constant 0 : index
    %c0_64 = arith.constant 0 : index
    %69 = vector.load %arg8[%68, %c0_63, %c0_64] : memref<8x8x128xf32, #tpu.memory_space<vmem>>, vector<1x8x128xf32>
    %70 = vector.shape_cast %69 : vector<1x8x128xf32> to vector<8x128xf32>
    %c0_65 = arith.constant 0 : index
    %c0_66 = arith.constant 0 : index
    %71 = vector.load %arg9[%c0_65, %c0_66] : memref<8x128xf32, #tpu.memory_space<vmem>>, vector<8x128xf32>
    %cst_67 = arith.constant dense<0.000000e+00> : vector<8x128xf32>
    %72 = tpu.matmul %71, %11, %cst_67 {dimension_numbers = #tpu.dot_dimension_numbers<[1], [0], [0], [1], [0, 0, 1, 1], [], []>} : vector<8x128xf32>, vector<128x128xf32>, vector<8x128xf32> -> vector<8x128xf32>
    %73 = arith.addf %70, %72 : vector<8x128xf32>
    %74 = math.tanh %73 : vector<8x128xf32>
    %c0_68 = arith.constant 0 : index
    %c0_69 = arith.constant 0 : index
    %75 = vector.load %arg9[%c0_68, %c0_69] : memref<8x128xf32, #tpu.memory_space<vmem>>, vector<8x128xf32>
    tpu.vector_store %arg9[%c0_68, %c0_69], %74 {strides = array<i32>} : memref<8x128xf32, #tpu.memory_space<vmem>>, vector<8x128xf32>,
    %c8_i32 = arith.constant 8 : i32
    %c0_70 = arith.constant 0 : index
    %c0_71 = arith.constant 0 : index
    %76 = vector.load %arg9[%c0_70, %c0_71] : memref<8x128xf32, #tpu.memory_space<vmem>>, vector<8x128xf32>
    %c0_72 = arith.constant 0 : index
    %c0_73 = arith.constant 0 : index
    %77 = vector.load %arg5[%c0_72, %c0_73] : memref<128x128xf32, #tpu.memory_space<vmem>>, vector<128x128xf32>
    %cst_74 = arith.constant dense<0.000000e+00> : vector<8x128xf32>
    %78 = tpu.matmul %76, %77, %cst_74 {dimension_numbers = #tpu.dot_dimension_numbers<[1], [0], [0], [1], [0, 0, 1, 1], [], []>} : vector<8x128xf32>, vector<128x128xf32>, vector<8x128xf32> -> vector<8x128xf32>
    %c0_75 = arith.constant 0 : index
    %c0_76 = arith.constant 0 : index
    %79 = vector.load %arg6[%c0_75, %c0_76] : memref<1x128xf32, #tpu.memory_space<vmem>>, vector<1x128xf32>
    %80 = vector.broadcast %79 : vector<1x128xf32> to vector<8x128xf32>
    %81 = arith.addf %78, %80 : vector<8x128xf32>
    %c0_77 = arith.constant 0 : index
    %c0_78 = arith.constant 0 : index
    %82 = vector.load %arg7[%c0_77, %c0_78] : memref<8x128xf32, #tpu.memory_space<vmem>>, vector<8x128xf32>
    tpu.vector_store %arg7[%c0_77, %c0_78], %81 {strides = array<i32>} : memref<8x128xf32, #tpu.memory_space<vmem>>, vector<8x128xf32>,
    return
  }
  func.func @transform_0(%arg0: i32) -> (i32, i32, i32) {
    %c0_i32 = arith.constant 0 : i32
    %c0_i32_0 = arith.constant 0 : i32
    %c0_i32_1 = arith.constant 0 : i32
    return %c0_i32, %arg0, %c0_i32_0 : i32, i32, i32
  }
  func.func @transform_1(%arg0: i32) -> (i32, i32) {
    %c0_i32 = arith.constant 0 : i32
    %c0_i32_0 = arith.constant 0 : i32
    %c0_i32_1 = arith.constant 0 : i32
    return %c0_i32, %c0_i32_0 : i32, i32
  }
  func.func @transform_2(%arg0: i32) -> (i32, i32) {
    %c0_i32 = arith.constant 0 : i32
    %c0_i32_0 = arith.constant 0 : i32
    %c0_i32_1 = arith.constant 0 : i32
    return %c0_i32, %c0_i32_0 : i32, i32
  }
  func.func @transform_3(%arg0: i32) -> (i32, i32) {
    %c0_i32 = arith.constant 0 : i32
    %c0_i32_0 = arith.constant 0 : i32
    %c0_i32_1 = arith.constant 0 : i32
    return %c0_i32, %c0_i32_0 : i32, i32
  }
  func.func @transform_4(%arg0: i32) -> (i32, i32) {
    %c0_i32 = arith.constant 0 : i32
    %c0_i32_0 = arith.constant 0 : i32
    %c0_i32_1 = arith.constant 0 : i32
    return %c0_i32, %c0_i32_0 : i32, i32
  }
  func.func @transform_5(%arg0: i32) -> (i32, i32) {
    %c0_i32 = arith.constant 0 : i32
    %c0_i32_0 = arith.constant 0 : i32
    %c0_i32_1 = arith.constant 0 : i32
    return %c0_i32, %c0_i32_0 : i32, i32
  }
  func.func @transform_6(%arg0: i32) -> (i32, i32) {
    %c0_i32 = arith.constant 0 : i32
    %c0_i32_0 = arith.constant 0 : i32
    return %arg0, %c0_i32 : i32, i32
  }
}

</mosaic_0001>

<llo_original>
// kernel: tpu_custom_call.1
$region0: #{tpu_custom_call.1}
  #allocation0 [shape = 'u32[]', space=smem, size = 0x4, offset = 0x4, fixed_abs, tag = 'smem constant byte address 0x4 - core index']
  #allocation1 [shape = 'u32[144,128]{1,0:T(1,128)}', space=vmem, size = 0x12000, scoped, tag = 'internal scratch']
  #allocation2 [shape = 'f32[8,8,128]{2,1,0:T(8,128)}', space=vmem, size = 0x8000, scoped, tag = 'scratch operand']
  #allocation3 [shape = 'f32[8,128]{1,0:T(8,128)}', space=vmem, size = 0x1000, scoped, tag = 'scratch operand']
  %s0 = inlined_call_operand.hbm [shape: f32[8,8,128], index: 0, kind: input, shape index: {}]
  %s1 = inlined_call_operand.hbm [shape: f32[128,128], index: 1, kind: input, shape index: {}]
  %s2 = inlined_call_operand.hbm [shape: f32[128,128], index: 2, kind: input, shape index: {}]
  %s3 = inlined_call_operand.vmem [shape: f32[1,128], index: 3, kind: input, shape index: {}]
  %s4 = inlined_call_operand.hbm [shape: f32[128,128], index: 4, kind: input, shape index: {}]
  %s5 = inlined_call_operand.vmem [shape: f32[1,128], index: 5, kind: input, shape index: {}]
  %s6 = inlined_call_operand.hbm [shape: f32[8,128], index: 6, kind: output, shape index: {}]
  %s7 = sld [smem:[#allocation0]]
  $region50: #{tpu_custom_call.1} parent=0
    _
  %s9 = ssub.s32 1, %s7
  %s10 = scalar_select 0, %s9, %s7
  $region1: #{tpu_custom_call.1} parent=0
    #allocation4 [shape = 'u8[32768]{0}', space=vmem, size = 0x8000, scoped, tag = 'input window, operand 0, single buffered']
    #allocation5 [shape = 's32[1]{0}', space=sflag, size = 0x4, scoped, tag = 'scoped memory for tpu_custom_call.1']
    #allocation6 [shape = 's32[1]{0}', space=sflag, size = 0x4, scoped, tag = 'scoped memory for tpu_custom_call.1']
    #allocation7 [shape = 'u8[65536]{0}', space=vmem, size = 0x10000, scoped, tag = 'input window, operand 1, single buffered']
    #allocation8 [shape = 's32[1]{0}', space=sflag, size = 0x4, scoped, tag = 'scoped memory for tpu_custom_call.1']
    #allocation9 [shape = 'u8[65536]{0}', space=vmem, size = 0x10000, scoped, tag = 'input window, operand 2, single buffered']
    #allocation10 [shape = 'u8[65536]{0}', space=vmem, size = 0x10000, scoped, tag = 'input window, operand 4, single buffered']
    #allocation11 [shape = 's32[1]{0}', space=sflag, size = 0x4, scoped, tag = 'scoped memory for tpu_custom_call.1']
    #allocation12 [shape = 'u8[4096]{0}', space=vmem, size = 0x1000, scoped, tag = 'output window, operand 0, single buffered']
    %11 = vsyncpa [#allocation5], 0
    %12 = vsyncpa [#allocation8], 0
    %13 = vsyncpa [#allocation11], 0
    %14 = vsyncpa [#allocation6], 0
    // Predicated region
    $region2: #{tpu_custom_call.1} parent=1 // pred_check
      _
    $region3: #{tpu_custom_call.1} parent=1 // pred_check_branch
      %16 = sbr.rel (0) target = $region5
    $region4: #{tpu_custom_call.1} parent=1 // pred_region
      %s18 = ssub.s32 1024, 1024
      %19 = vsyncadd [#allocation5], %s18
      %s20 = sshll.u32 [#allocation4], 4
      %s21 = int_to_ptr.vmem [resolvable:$true] %s20
      %26 = dma.hbm_to_vmem [thread:$0]  %s0, 1024, %s21, [#allocation5], 128, 128, 8
    $region5: #{tpu_custom_call.1} parent=1 // pred_fallthru
      _
    // Predicated region
    $region6: #{tpu_custom_call.1} parent=1 // pred_check
      _
    $region7: #{tpu_custom_call.1} parent=1 // pred_check_branch
      %28 = sbr.rel (0) target = $region9
    $region8: #{tpu_custom_call.1} parent=1 // pred_region
      %s30 = ssub.s32 2048, 2048
      %31 = vsyncadd [#allocation8], %s30
      %s32 = sshll.u32 [#allocation7], 4
      %s33 = int_to_ptr.vmem [resolvable:$true] %s32
      %38 = dma.hbm_to_vmem [thread:$0]  %s1, 2048, %s33, [#allocation8], 128, 128, 8
    $region9: #{tpu_custom_call.1} parent=1 // pred_fallthru
      _
    // Predicated region
    $region10: #{tpu_custom_call.1} parent=1 // pred_check
      _
    $region11: #{tpu_custom_call.1} parent=1 // pred_check_branch
      %40 = sbr.rel (0) target = $region13
    $region12: #{tpu_custom_call.1} parent=1 // pred_region
      %s42 = ssub.s32 2048, 2048
      %43 = vsyncadd [#allocation8], %s42
      %s44 = sshll.u32 [#allocation9], 4
      %s45 = int_to_ptr.vmem [resolvable:$true] %s44
      %50 = dma.hbm_to_vmem [thread:$0]  %s2, 2048, %s45, [#allocation8], 128, 128, 8
    $region13: #{tpu_custom_call.1} parent=1 // pred_fallthru
      _
    // Predicated region
    $region14: #{tpu_custom_call.1} parent=1 // pred_check
      _
    $region15: #{tpu_custom_call.1} parent=1 // pred_check_branch
      %52 = sbr.rel (0) target = $region17
    $region16: #{tpu_custom_call.1} parent=1 // pred_region
      _
    $region17: #{tpu_custom_call.1} parent=1 // pred_fallthru
      _
    // Predicated region
    $region18: #{tpu_custom_call.1} parent=1 // pred_check
      _
    $region19: #{tpu_custom_call.1} parent=1 // pred_check_branch
      %54 = sbr.rel (0) target = $region21
    $region20: #{tpu_custom_call.1} parent=1 // pred_region
      %s56 = ssub.s32 2048, 2048
      %57 = vsyncadd [#allocation11], %s56
      %s58 = sshll.u32 [#allocation10], 4
      %s59 = int_to_ptr.vmem [resolvable:$true] %s58
      %64 = dma.hbm_to_vmem [thread:$0]  %s4, 2048, %s59, [#allocation11], 128, 128, 8
    $region21: #{tpu_custom_call.1} parent=1 // pred_fallthru
      _
    // Predicated region
    $region22: #{tpu_custom_call.1} parent=1 // pred_check
      _
    $region23: #{tpu_custom_call.1} parent=1 // pred_check_branch
      %66 = sbr.rel (0) target = $region25
    $region24: #{tpu_custom_call.1} parent=1 // pred_region
      _
    $region25: #{tpu_custom_call.1} parent=1 // pred_fallthru
      _
    // Predicated region
    $region26: #{tpu_custom_call.1} parent=1 // pred_check
      _
    $region27: #{tpu_custom_call.1} parent=1 // pred_check_branch
      %68 = sbr.rel (0) target = $region29
    $region28: #{tpu_custom_call.1} parent=1 // pred_region
      %69 = dma.done [#allocation5], 1024
    $region29: #{tpu_custom_call.1} parent=1 // pred_fallthru
      _
    // Predicated region
    $region30: #{tpu_custom_call.1} parent=1 // pred_check
      _
    $region31: #{tpu_custom_call.1} parent=1 // pred_check_branch
      %71 = sbr.rel (0) target = $region33
    $region32: #{tpu_custom_call.1} parent=1 // pred_region
      %72 = dma.done [#allocation8], 2048
    $region33: #{tpu_custom_call.1} parent=1 // pred_fallthru
      _
    // Predicated region
    $region34: #{tpu_custom_call.1} parent=1 // pred_check
      _
    $region35: #{tpu_custom_call.1} parent=1 // pred_check_branch
      %74 = sbr.rel (0) target = $region37
    $region36: #{tpu_custom_call.1} parent=1 // pred_region
      %75 = dma.done [#allocation8], 2048
    $region37: #{tpu_custom_call.1} parent=1 // pred_fallthru
      _
    // Predicated region
    $region38: #{tpu_custom_call.1} parent=1 // pred_check
      _
    $region39: #{tpu_custom_call.1} parent=1 // pred_check_branch
      %77 = sbr.rel (0) target = $region41
    $region40: #{tpu_custom_call.1} parent=1 // pred_region
      %78 = dma.done [#allocation11], 2048
    $region41: #{tpu_custom_call.1} parent=1 // pred_fallthru
      _
    %v79 = vld [vmem:[#allocation4] sm:$0xff]
    %v80 = vld [vmem:[#allocation4 + $0x8] sm:$0xff]
    %v81 = vld [vmem:[#allocation4 + $0x10] sm:$0xff]
    %v82 = vld [vmem:[#allocation4 + $0x18] sm:$0xff]
    %v83 = vld [vmem:[#allocation4 + $0x20] sm:$0xff]
    %v84 = vld [vmem:[#allocation4 + $0x28] sm:$0xff]
    %v85 = vld [vmem:[#allocation4 + $0x30] sm:$0xff]
    %v86 = vld [vmem:[#allocation4 + $0x38] sm:$0xff]
    %v87 = vld [vmem:[#allocation7] sm:$0xff]
    %v88 = vld [vmem:[#allocation7 + $0x8] sm:$0xff]
    %v89 = vld [vmem:[#allocation7 + $0x10] sm:$0xff]
    %v90 = vld [vmem:[#allocation7 + $0x18] sm:$0xff]
    %v91 = vld [vmem:[#allocation7 + $0x20] sm:$0xff]
    %v92 = vld [vmem:[#allocation7 + $0x28] sm:$0xff]
    %v93 = vld [vmem:[#allocation7 + $0x30] sm:$0xff]
    %v94 = vld [vmem:[#allocation7 + $0x38] sm:$0xff]
    %v95 = vld [vmem:[#allocation7 + $0x40] sm:$0xff]
    %v96 = vld [vmem:[#allocation7 + $0x48] sm:$0xff]
    %v97 = vld [vmem:[#allocation7 + $0x50] sm:$0xff]
    %v98 = vld [vmem:[#allocation7 + $0x58] sm:$0xff]
    %v99 = vld [vmem:[#allocation7 + $0x60] sm:$0xff]
    %v100 = vld [vmem:[#allocation7 + $0x68] sm:$0xff]
    %v101 = vld [vmem:[#allocation7 + $0x70] sm:$0xff]
    %v102 = vld [vmem:[#allocation7 + $0x78] sm:$0xff]
    %v103 = vld [vmem:[%s3] sm:$0x1]
    %v105 = vlaneseq
    %v106 = vshrl.u32 %v105, 7
    %v107 = vsub.s32 0, %v106
    %v108 = vrot.slane %v103, %v107
    %110 = vmatprep.subr.mxu0 0.0
    %111 = vmatpush1.msra.mxu0 %v87
    %112 = vmatprep.subr.mxu0 0.0
    %113 = vmatpush1.msra.mxu0 %v88
    %114 = vmatprep.subr.mxu0 0.0
    %115 = vmatpush1.msra.mxu0 %v89
    %116 = vmatprep.subr.mxu0 0.0
    %117 = vmatpush1.msra.mxu0 %v90
    %118 = vmatprep.subr.mxu0 0.0
    %119 = vmatpush1.msra.mxu0 %v91
    %120 = vmatprep.subr.mxu0 0.0
    %121 = vmatpush1.msra.mxu0 %v92
    %122 = vmatprep.subr.mxu0 0.0
    %123 = vmatpush1.msra.mxu0 %v93
    %124 = vmatprep.subr.mxu0 0.0
    %125 = vmatpush1.msra.mxu0 %v94
    %126 = vmatprep.subr.mxu0 0.0
    %127 = vmatpush1.msra.mxu0 %v95
    %128 = vmatprep.subr.mxu0 0.0
    %129 = vmatpush1.msra.mxu0 %v96
    %130 = vmatprep.subr.mxu0 0.0
    %131 = vmatpush1.msra.mxu0 %v97
    %132 = vmatprep.subr.mxu0 0.0
    %133 = vmatpush1.msra.mxu0 %v98
    %134 = vmatprep.subr.mxu0 0.0
    %135 = vmatpush1.msra.mxu0 %v99
    %136 = vmatprep.subr.mxu0 0.0
    %137 = vmatpush1.msra.mxu0 %v100
    %138 = vmatprep.subr.mxu0 0.0
    %139 = vmatpush1.msra.mxu0 %v101
    %140 = vmatprep.subr.mxu0 0.0
    %141 = vmatpush1.msra.mxu0 %v102
    %142 = vmatprep.subr.mxu0 0.0
    %143 = vmatpush1.msra.mxu0 0.0
    %144 = vmatprep.subr.mxu0 0.0
    %145 = vmatpush1.msra.mxu0 0.0
    %146 = vmatprep.subr.mxu0 0.0
    %147 = vmatpush1.msra.mxu0 0.0
    %148 = vmatprep.subr.mxu0 0.0
    %149 = vmatpush1.msra.mxu0 0.0
    %150 = vmatprep.subr.mxu0 0.0
    %151 = vmatpush1.msra.mxu0 0.0
    %152 = vmatprep.subr.mxu0 0.0
    %153 = vmatpush1.msra.mxu0 0.0
    %154 = vmatprep.subr.mxu0 0.0
    %155 = vmatpush1.msra.mxu0 0.0
    %156 = vmatprep.subr.mxu0 0.0
    %157 = vmatpush1.msra.mxu0 0.0
    %158 = vmatprep.subr.mxu0 0.0
    %159 = vmatpush1.msra.mxu0 0.0
    %160 = vmatprep.subr.mxu0 0.0
    %161 = vmatpush1.msra.mxu0 0.0
    %162 = vmatprep.subr.mxu0 0.0
    %163 = vmatpush1.msra.mxu0 0.0
    %164 = vmatprep.subr.mxu0 0.0
    %165 = vmatpush1.msra.mxu0 0.0
    %166 = vmatprep.subr.mxu0 0.0
    %167 = vmatpush1.msra.mxu0 0.0
    %168 = vmatprep.subr.mxu0 0.0
    %169 = vmatpush1.msra.mxu0 0.0
    %170 = vmatprep.subr.mxu0 0.0
    %171 = vmatpush1.msra.mxu0 0.0
    %172 = vmatprep.subr.mxu0 0.0
    %173 = vmatpush1.msra.mxu0 0.0
    %174 = vmatprep.mubr.f32.mxu0 0.0
    %175 = vmatmul.mubr.f32.gmra.mrb[0].mxu0 %v79
    %v176 = vpop.f32.mrb[0].mxu0
    %v177 = vadd.f32 %v108, %v176
    %v178 = vpop.f32.mrb[0].mxu0
    %179 = vmatprep.mubr.f32.mxu0 0.0
    %180 = vmatmul.mubr.f32.gmra.mrb[0].mxu0 %v80
    %v181 = vpop.f32.mrb[0].mxu0
    %v182 = vadd.f32 %v108, %v181
    %v183 = vpop.f32.mrb[0].mxu0
    %184 = vmatprep.mubr.f32.mxu0 0.0
    %185 = vmatmul.mubr.f32.gmra.mrb[0].mxu0 %v81
    %v186 = vpop.f32.mrb[0].mxu0
    %v187 = vadd.f32 %v108, %v186
    %v188 = vpop.f32.mrb[0].mxu0
    %189 = vmatprep.mubr.f32.mxu0 0.0
    %190 = vmatmul.mubr.f32.gmra.mrb[0].mxu0 %v82
    %v191 = vpop.f32.mrb[0].mxu0
    %v192 = vadd.f32 %v108, %v191
    %v193 = vpop.f32.mrb[0].mxu0
    %194 = vmatprep.mubr.f32.mxu0 0.0
    %195 = vmatmul.mubr.f32.gmra.mrb[0].mxu0 %v83
    %v196 = vpop.f32.mrb[0].mxu0
    %v197 = vadd.f32 %v108, %v196
    %v198 = vpop.f32.mrb[0].mxu0
    %199 = vmatprep.mubr.f32.mxu0 0.0
    %200 = vmatmul.mubr.f32.gmra.mrb[0].mxu0 %v84
    %v201 = vpop.f32.mrb[0].mxu0
    %v202 = vadd.f32 %v108, %v201
    %v203 = vpop.f32.mrb[0].mxu0
    %204 = vmatprep.mubr.f32.mxu0 0.0
    %205 = vmatmul.mubr.f32.gmra.mrb[0].mxu0 %v85
    %v206 = vpop.f32.mrb[0].mxu0
    %v207 = vadd.f32 %v108, %v206
    %v208 = vpop.f32.mrb[0].mxu0
    %209 = vmatprep.mubr.f32.mxu0 0.0
    %210 = vmatmul.mubr.f32.gmra.mrb[0].mxu0 %v86
    %v211 = vpop.f32.mrb[0].mxu0
    %v212 = vadd.f32 %v108, %v211
    %v213 = vpop.f32.mrb[0].mxu0
    %214 = vdwg.mxu0
    %215 = vst [vmem:[#allocation2] sm:$0xff] %v177
    %216 = vst [vmem:[#allocation2 + $0x8] sm:$0xff] %v182
    %217 = vst [vmem:[#allocation2 + $0x10] sm:$0xff] %v187
    %218 = vst [vmem:[#allocation2 + $0x18] sm:$0xff] %v192
    %219 = vst [vmem:[#allocation2 + $0x20] sm:$0xff] %v197
    %220 = vst [vmem:[#allocation2 + $0x28] sm:$0xff] %v202
    %221 = vst [vmem:[#allocation2 + $0x30] sm:$0xff] %v207
    %222 = vst [vmem:[#allocation2 + $0x38] sm:$0xff] %v212
    %223 = vst [vmem:[#allocation3] sm:$0xff] 0.0
    %v224 = vld [vmem:[#allocation9] sm:$0xff]
    %v225 = vld [vmem:[#allocation9 + $0x8] sm:$0xff]
    %v226 = vld [vmem:[#allocation9 + $0x10] sm:$0xff]
    %v227 = vld [vmem:[#allocation9 + $0x18] sm:$0xff]
    %v228 = vld [vmem:[#allocation9 + $0x20] sm:$0xff]
    %v229 = vld [vmem:[#allocation9 + $0x28] sm:$0xff]
    %v230 = vld [vmem:[#allocation9 + $0x30] sm:$0xff]
    %v231 = vld [vmem:[#allocation9 + $0x38] sm:$0xff]
    %v232 = vld [vmem:[#allocation9 + $0x40] sm:$0xff]
    %v233 = vld [vmem:[#allocation9 + $0x48] sm:$0xff]
    %v234 = vld [vmem:[#allocation9 + $0x50] sm:$0xff]
    %v235 = vld [vmem:[#allocation9 + $0x58] sm:$0xff]
    %v236 = vld [vmem:[#allocation9 + $0x60] sm:$0xff]
    %v237 = vld [vmem:[#allocation9 + $0x68] sm:$0xff]
    %v238 = vld [vmem:[#allocation9 + $0x70] sm:$0xff]
    %v239 = vld [vmem:[#allocation9 + $0x78] sm:$0xff]
    %v240 = vld [vmem:[#allocation2] sm:$0xff]
    %v241 = vld [vmem:[#allocation3] sm:$0xff]
    %242 = vmatprep.subr.mxu0 0.0
    %243 = vmatpush1.msra.mxu0 %v224
    %244 = vmatprep.subr.mxu0 0.0
    %245 = vmatpush1.msra.mxu0 %v225
    %246 = vmatprep.subr.mxu0 0.0
    %247 = vmatpush1.msra.mxu0 %v226
    %248 = vmatprep.subr.mxu0 0.0
    %249 = vmatpush1.msra.mxu0 %v227
    %250 = vmatprep.subr.mxu0 0.0
    %251 = vmatpush1.msra.mxu0 %v228
    %252 = vmatprep.subr.mxu0 0.0
    %253 = vmatpush1.msra.mxu0 %v229
    %254 = vmatprep.subr.mxu0 0.0
    %255 = vmatpush1.msra.mxu0 %v230
    %256 = vmatprep.subr.mxu0 0.0
    %257 = vmatpush1.msra.mxu0 %v231
    %258 = vmatprep.subr.mxu0 0.0
    %259 = vmatpush1.msra.mxu0 %v232
    %260 = vmatprep.subr.mxu0 0.0
    %261 = vmatpush1.msra.mxu0 %v233
    %262 = vmatprep.subr.mxu0 0.0
    %263 = vmatpush1.msra.mxu0 %v234
    %264 = vmatprep.subr.mxu0 0.0
    %265 = vmatpush1.msra.mxu0 %v235
    %266 = vmatprep.subr.mxu0 0.0
    %267 = vmatpush1.msra.mxu0 %v236
    %268 = vmatprep.subr.mxu0 0.0
    %269 = vmatpush1.msra.mxu0 %v237
    %270 = vmatprep.subr.mxu0 0.0
    %271 = vmatpush1.msra.mxu0 %v238
    %272 = vmatprep.subr.mxu0 0.0
    %273 = vmatpush1.msra.mxu0 %v239
    %274 = vmatprep.subr.mxu0 0.0
    %275 = vmatpush1.msra.mxu0 0.0
    %276 = vmatprep.subr.mxu0 0.0
    %277 = vmatpush1.msra.mxu0 0.0
    %278 = vmatprep.subr.mxu0 0.0
    %279 = vmatpush1.msra.mxu0 0.0
    %280 = vmatprep.subr.mxu0 0.0
    %281 = vmatpush1.msra.mxu0 0.0
    %282 = vmatprep.subr.mxu0 0.0
    %283 = vmatpush1.msra.mxu0 0.0
    %284 = vmatprep.subr.mxu0 0.0
    %285 = vmatpush1.msra.mxu0 0.0
    %286 = vmatprep.subr.mxu0 0.0
    %287 = vmatpush1.msra.mxu0 0.0
    %288 = vmatprep.subr.mxu0 0.0
    %289 = vmatpush1.msra.mxu0 0.0
    %290 = vmatprep.subr.mxu0 0.0
    %291 = vmatpush1.msra.mxu0 0.0
    %292 = vmatprep.subr.mxu0 0.0
    %293 = vmatpush1.msra.mxu0 0.0
    %294 = vmatprep.subr.mxu0 0.0
    %295 = vmatpush1.msra.mxu0 0.0
    %296 = vmatprep.subr.mxu0 0.0
    %297 = vmatpush1.msra.mxu0 0.0
    %298 = vmatprep.subr.mxu0 0.0
    %299 = vmatpush1.msra.mxu0 0.0
    %300 = vmatprep.subr.mxu0 0.0
    %301 = vmatpush1.msra.mxu0 0.0
    %302 = vmatprep.subr.mxu0 0.0
    %303 = vmatpush1.msra.mxu0 0.0
    %304 = vmatprep.subr.mxu0 0.0
    %305 = vmatpush1.msra.mxu0 0.0
    %306 = vmatprep.mubr.f32.mxu0 0.0
    %307 = vmatmul.mubr.f32.gmra.mrb[0].mxu0 %v241
    %v308 = vpop.f32.mrb[0].mxu0
    %v309 = vadd.f32 0.0, %v308
    %v310 = vpop.f32.mrb[0].mxu0
    %311 = vdwg.mxu0
    %v312 = vadd.f32 %v240, %v309
    %v313 = vtanh.pop %v312
    %314 = vst [vmem:[#allocation3] sm:$0xff] %v313
    %s315 = scalar_lea.vmem [#allocation2], 8
    %v316 = vld [vmem:[%s315] sm:$0xff]
    %v317 = vld [vmem:[#allocation3] sm:$0xff]
    %318 = vmatprep.subr.mxu0 0.0
    %319 = vmatpush1.msra.mxu0 %v224
    %320 = vmatprep.subr.mxu0 0.0
    %321 = vmatpush1.msra.mxu0 %v225
    %322 = vmatprep.subr.mxu0 0.0
    %323 = vmatpush1.msra.mxu0 %v226
    %324 = vmatprep.subr.mxu0 0.0
    %325 = vmatpush1.msra.mxu0 %v227
    %326 = vmatprep.subr.mxu0 0.0
    %327 = vmatpush1.msra.mxu0 %v228
    %328 = vmatprep.subr.mxu0 0.0
    %329 = vmatpush1.msra.mxu0 %v229
    %330 = vmatprep.subr.mxu0 0.0
    %331 = vmatpush1.msra.mxu0 %v230
    %332 = vmatprep.subr.mxu0 0.0
    %333 = vmatpush1.msra.mxu0 %v231
    %334 = vmatprep.subr.mxu0 0.0
    %335 = vmatpush1.msra.mxu0 %v232
    %336 = vmatprep.subr.mxu0 0.0
    %337 = vmatpush1.msra.mxu0 %v233
    %338 = vmatprep.subr.mxu0 0.0
    %339 = vmatpush1.msra.mxu0 %v234
    %340 = vmatprep.subr.mxu0 0.0
    %341 = vmatpush1.msra.mxu0 %v235
    %342 = vmatprep.subr.mxu0 0.0
    %343 = vmatpush1.msra.mxu0 %v236
    %344 = vmatprep.subr.mxu0 0.0
    %345 = vmatpush1.msra.mxu0 %v237
    %346 = vmatprep.subr.mxu0 0.0
    %347 = vmatpush1.msra.mxu0 %v238
    %348 = vmatprep.subr.mxu0 0.0
    %349 = vmatpush1.msra.mxu0 %v239
    %350 = vmatprep.subr.mxu0 0.0
    %351 = vmatpush1.msra.mxu0 0.0
    %352 = vmatprep.subr.mxu0 0.0
    %353 = vmatpush1.msra.mxu0 0.0
    %354 = vmatprep.subr.mxu0 0.0
    %355 = vmatpush1.msra.mxu0 0.0
    %356 = vmatprep.subr.mxu0 0.0
    %357 = vmatpush1.msra.mxu0 0.0
    %358 = vmatprep.subr.mxu0 0.0
    %359 = vmatpush1.msra.mxu0 0.0
    %360 = vmatprep.subr.mxu0 0.0
    %361 = vmatpush1.msra.mxu0 0.0
    %362 = vmatprep.subr.mxu0 0.0
    %363 = vmatpush1.msra.mxu0 0.0
    %364 = vmatprep.subr.mxu0 0.0
    %365 = vmatpush1.msra.mxu0 0.0
    %366 = vmatprep.subr.mxu0 0.0
    %367 = vmatpush1.msra.mxu0 0.0
    %368 = vmatprep.subr.mxu0 0.0
    %369 = vmatpush1.msra.mxu0 0.0
    %370 = vmatprep.subr.mxu0 0.0
    %371 = vmatpush1.msra.mxu0 0.0
    %372 = vmatprep.subr.mxu0 0.0
    %373 = vmatpush1.msra.mxu0 0.0
    %374 = vmatprep.subr.mxu0 0.0
    %375 = vmatpush1.msra.mxu0 0.0
    %376 = vmatprep.subr.mxu0 0.0
    %377 = vmatpush1.msra.mxu0 0.0
    %378 = vmatprep.subr.mxu0 0.0
    %379 = vmatpush1.msra.mxu0 0.0
    %380 = vmatprep.subr.mxu0 0.0
    %381 = vmatpush1.msra.mxu0 0.0
    %382 = vmatprep.mubr.f32.mxu0 0.0
    %383 = vmatmul.mubr.f32.gmra.mrb[0].mxu0 %v317
    %v384 = vpop.f32.mrb[0].mxu0
    %v385 = vadd.f32 0.0, %v384
    %v386 = vpop.f32.mrb[0].mxu0
    %387 = vdwg.mxu0
    %v388 = vadd.f32 %v316, %v385
    %v389 = vtanh.pop %v388
    %390 = vst [vmem:[#allocation3] sm:$0xff] %v389
    %s391 = scalar_lea.vmem [#allocation2], 16
    %v392 = vld [vmem:[%s391] sm:$0xff]
    %v393 = vld [vmem:[#allocation3] sm:$0xff]
    %394 = vmatprep.subr.mxu0 0.0
    %395 = vmatpush1.msra.mxu0 %v224
    %396 = vmatprep.subr.mxu0 0.0
    %397 = vmatpush1.msra.mxu0 %v225
    %398 = vmatprep.subr.mxu0 0.0
    %399 = vmatpush1.msra.mxu0 %v226
    %400 = vmatprep.subr.mxu0 0.0
    %401 = vmatpush1.msra.mxu0 %v227
    %402 = vmatprep.subr.mxu0 0.0
    %403 = vmatpush1.msra.mxu0 %v228
    %404 = vmatprep.subr.mxu0 0.0
    %405 = vmatpush1.msra.mxu0 %v229
    %406 = vmatprep.subr.mxu0 0.0
    %407 = vmatpush1.msra.mxu0 %v230
    %408 = vmatprep.subr.mxu0 0.0
    %409 = vmatpush1.msra.mxu0 %v231
    %410 = vmatprep.subr.mxu0 0.0
    %411 = vmatpush1.msra.mxu0 %v232
    %412 = vmatprep.subr.mxu0 0.0
    %413 = vmatpush1.msra.mxu0 %v233
    %414 = vmatprep.subr.mxu0 0.0
    %415 = vmatpush1.msra.mxu0 %v234
    %416 = vmatprep.subr.mxu0 0.0
    %417 = vmatpush1.msra.mxu0 %v235
    %418 = vmatprep.subr.mxu0 0.0
    %419 = vmatpush1.msra.mxu0 %v236
    %420 = vmatprep.subr.mxu0 0.0
    %421 = vmatpush1.msra.mxu0 %v237
    %422 = vmatprep.subr.mxu0 0.0
    %423 = vmatpush1.msra.mxu0 %v238
    %424 = vmatprep.subr.mxu0 0.0
    %425 = vmatpush1.msra.mxu0 %v239
    %426 = vmatprep.subr.mxu0 0.0
    %427 = vmatpush1.msra.mxu0 0.0
    %428 = vmatprep.subr.mxu0 0.0
    %429 = vmatpush1.msra.mxu0 0.0
    %430 = vmatprep.subr.mxu0 0.0
    %431 = vmatpush1.msra.mxu0 0.0
    %432 = vmatprep.subr.mxu0 0.0
    %433 = vmatpush1.msra.mxu0 0.0
    %434 = vmatprep.subr.mxu0 0.0
    %435 = vmatpush1.msra.mxu0 0.0
    %436 = vmatprep.subr.mxu0 0.0
    %437 = vmatpush1.msra.mxu0 0.0
    %438 = vmatprep.subr.mxu0 0.0
    %439 = vmatpush1.msra.mxu0 0.0
    %440 = vmatprep.subr.mxu0 0.0
    %441 = vmatpush1.msra.mxu0 0.0
    %442 = vmatprep.subr.mxu0 0.0
    %443 = vmatpush1.msra.mxu0 0.0
    %444 = vmatprep.subr.mxu0 0.0
    %445 = vmatpush1.msra.mxu0 0.0
    %446 = vmatprep.subr.mxu0 0.0
    %447 = vmatpush1.msra.mxu0 0.0
    %448 = vmatprep.subr.mxu0 0.0
    %449 = vmatpush1.msra.mxu0 0.0
    %450 = vmatprep.subr.mxu0 0.0
    %451 = vmatpush1.msra.mxu0 0.0
    %452 = vmatprep.subr.mxu0 0.0
    %453 = vmatpush1.msra.mxu0 0.0
    %454 = vmatprep.subr.mxu0 0.0
    %455 = vmatpush1.msra.mxu0 0.0
    %456 = vmatprep.subr.mxu0 0.0
    %457 = vmatpush1.msra.mxu0 0.0
    %458 = vmatprep.mubr.f32.mxu0 0.0
    %459 = vmatmul.mubr.f32.gmra.mrb[0].mxu0 %v393
    %v460 = vpop.f32.mrb[0].mxu0
    %v461 = vadd.f32 0.0, %v460
    %v462 = vpop.f32.mrb[0].mxu0
    %463 = vdwg.mxu0
    %v464 = vadd.f32 %v392, %v461
    %v465 = vtanh.pop %v464
    %466 = vst [vmem:[#allocation3] sm:$0xff] %v465
    %s467 = scalar_lea.vmem [#allocation2], 24
    %v468 = vld [vmem:[%s467] sm:$0xff]
    %v469 = vld [vmem:[#allocation3] sm:$0xff]
    %470 = vmatprep.subr.mxu0 0.0
    %471 = vmatpush1.msra.mxu0 %v224
    %472 = vmatprep.subr.mxu0 0.0
    %473 = vmatpush1.msra.mxu0 %v225
    %474 = vmatprep.subr.mxu0 0.0
    %475 = vmatpush1.msra.mxu0 %v226
    %476 = vmatprep.subr.mxu0 0.0
    %477 = vmatpush1.msra.mxu0 %v227
    %478 = vmatprep.subr.mxu0 0.0
    %479 = vmatpush1.msra.mxu0 %v228
    %480 = vmatprep.subr.mxu0 0.0
    %481 = vmatpush1.msra.mxu0 %v229
    %482 = vmatprep.subr.mxu0 0.0
    %483 = vmatpush1.msra.mxu0 %v230
    %484 = vmatprep.subr.mxu0 0.0
    %485 = vmatpush1.msra.mxu0 %v231
    %486 = vmatprep.subr.mxu0 0.0
    %487 = vmatpush1.msra.mxu0 %v232
    %488 = vmatprep.subr.mxu0 0.0
    %489 = vmatpush1.msra.mxu0 %v233
    %490 = vmatprep.subr.mxu0 0.0
    %491 = vmatpush1.msra.mxu0 %v234
    %492 = vmatprep.subr.mxu0 0.0
    %493 = vmatpush1.msra.mxu0 %v235
    %494 = vmatprep.subr.mxu0 0.0
    %495 = vmatpush1.msra.mxu0 %v236
    %496 = vmatprep.subr.mxu0 0.0
    %497 = vmatpush1.msra.mxu0 %v237
    %498 = vmatprep.subr.mxu0 0.0
    %499 = vmatpush1.msra.mxu0 %v238
    %500 = vmatprep.subr.mxu0 0.0
    %501 = vmatpush1.msra.mxu0 %v239
    %502 = vmatprep.subr.mxu0 0.0
    %503 = vmatpush1.msra.mxu0 0.0
    %504 = vmatprep.subr.mxu0 0.0
    %505 = vmatpush1.msra.mxu0 0.0
    %506 = vmatprep.subr.mxu0 0.0
    %507 = vmatpush1.msra.mxu0 0.0
    %508 = vmatprep.subr.mxu0 0.0
    %509 = vmatpush1.msra.mxu0 0.0
    %510 = vmatprep.subr.mxu0 0.0
    %511 = vmatpush1.msra.mxu0 0.0
    %512 = vmatprep.subr.mxu0 0.0
    %513 = vmatpush1.msra.mxu0 0.0
    %514 = vmatprep.subr.mxu0 0.0
    %515 = vmatpush1.msra.mxu0 0.0
    %516 = vmatprep.subr.mxu0 0.0
    %517 = vmatpush1.msra.mxu0 0.0
    %518 = vmatprep.subr.mxu0 0.0
    %519 = vmatpush1.msra.mxu0 0.0
    %520 = vmatprep.subr.mxu0 0.0
    %521 = vmatpush1.msra.mxu0 0.0
    %522 = vmatprep.subr.mxu0 0.0
    %523 = vmatpush1.msra.mxu0 0.0
    %524 = vmatprep.subr.mxu0 0.0
    %525 = vmatpush1.msra.mxu0 0.0
    %526 = vmatprep.subr.mxu0 0.0
    %527 = vmatpush1.msra.mxu0 0.0
    %528 = vmatprep.subr.mxu0 0.0
    %529 = vmatpush1.msra.mxu0 0.0
    %530 = vmatprep.subr.mxu0 0.0
    %531 = vmatpush1.msra.mxu0 0.0
    %532 = vmatprep.subr.mxu0 0.0
    %533 = vmatpush1.msra.mxu0 0.0
    %534 = vmatprep.mubr.f32.mxu0 0.0
    %535 = vmatmul.mubr.f32.gmra.mrb[0].mxu0 %v469
    %v536 = vpop.f32.mrb[0].mxu0
    %v537 = vadd.f32 0.0, %v536
    %v538 = vpop.f32.mrb[0].mxu0
    %539 = vdwg.mxu0
    %v540 = vadd.f32 %v468, %v537
    %v541 = vtanh.pop %v540
    %542 = vst [vmem:[#allocation3] sm:$0xff] %v541
    %s543 = scalar_lea.vmem [#allocation2], 32
    %v544 = vld [vmem:[%s543] sm:$0xff]
    %v545 = vld [vmem:[#allocation3] sm:$0xff]
    %546 = vmatprep.subr.mxu0 0.0
    %547 = vmatpush1.msra.mxu0 %v224
    %548 = vmatprep.subr.mxu0 0.0
    %549 = vmatpush1.msra.mxu0 %v225
    %550 = vmatprep.subr.mxu0 0.0
    %551 = vmatpush1.msra.mxu0 %v226
    %552 = vmatprep.subr.mxu0 0.0
    %553 = vmatpush1.msra.mxu0 %v227
    %554 = vmatprep.subr.mxu0 0.0
    %555 = vmatpush1.msra.mxu0 %v228
    %556 = vmatprep.subr.mxu0 0.0
    %557 = vmatpush1.msra.mxu0 %v229
    %558 = vmatprep.subr.mxu0 0.0
    %559 = vmatpush1.msra.mxu0 %v230
    %560 = vmatprep.subr.mxu0 0.0
    %561 = vmatpush1.msra.mxu0 %v231
    %562 = vmatprep.subr.mxu0 0.0
    %563 = vmatpush1.msra.mxu0 %v232
    %564 = vmatprep.subr.mxu0 0.0
    %565 = vmatpush1.msra.mxu0 %v233
    %566 = vmatprep.subr.mxu0 0.0
    %567 = vmatpush1.msra.mxu0 %v234
    %568 = vmatprep.subr.mxu0 0.0
    %569 = vmatpush1.msra.mxu0 %v235
    %570 = vmatprep.subr.mxu0 0.0
    %571 = vmatpush1.msra.mxu0 %v236
    %572 = vmatprep.subr.mxu0 0.0
    %573 = vmatpush1.msra.mxu0 %v237
    %574 = vmatprep.subr.mxu0 0.0
    %575 = vmatpush1.msra.mxu0 %v238
    %576 = vmatprep.subr.mxu0 0.0
    %577 = vmatpush1.msra.mxu0 %v239
    %578 = vmatprep.subr.mxu0 0.0
    %579 = vmatpush1.msra.mxu0 0.0
    %580 = vmatprep.subr.mxu0 0.0
    %581 = vmatpush1.msra.mxu0 0.0
    %582 = vmatprep.subr.mxu0 0.0
    %583 = vmatpush1.msra.mxu0 0.0
    %584 = vmatprep.subr.mxu0 0.0
    %585 = vmatpush1.msra.mxu0 0.0
    %586 = vmatprep.subr.mxu0 0.0
    %587 = vmatpush1.msra.mxu0 0.0
    %588 = vmatprep.subr.mxu0 0.0
    %589 = vmatpush1.msra.mxu0 0.0
    %590 = vmatprep.subr.mxu0 0.0
    %591 = vmatpush1.msra.mxu0 0.0
    %592 = vmatprep.subr.mxu0 0.0
    %593 = vmatpush1.msra.mxu0 0.0
    %594 = vmatprep.subr.mxu0 0.0
    %595 = vmatpush1.msra.mxu0 0.0
    %596 = vmatprep.subr.mxu0 0.0
    %597 = vmatpush1.msra.mxu0 0.0
    %598 = vmatprep.subr.mxu0 0.0
    %599 = vmatpush1.msra.mxu0 0.0
    %600 = vmatprep.subr.mxu0 0.0
    %601 = vmatpush1.msra.mxu0 0.0
    %602 = vmatprep.subr.mxu0 0.0
    %603 = vmatpush1.msra.mxu0 0.0
    %604 = vmatprep.subr.mxu0 0.0
    %605 = vmatpush1.msra.mxu0 0.0
    %606 = vmatprep.subr.mxu0 0.0
    %607 = vmatpush1.msra.mxu0 0.0
    %608 = vmatprep.subr.mxu0 0.0
    %609 = vmatpush1.msra.mxu0 0.0
    %610 = vmatprep.mubr.f32.mxu0 0.0
    %611 = vmatmul.mubr.f32.gmra.mrb[0].mxu0 %v545
    %v612 = vpop.f32.mrb[0].mxu0
    %v613 = vadd.f32 0.0, %v612
    %v614 = vpop.f32.mrb[0].mxu0
    %615 = vdwg.mxu0
    %v616 = vadd.f32 %v544, %v613
    %v617 = vtanh.pop %v616
    %618 = vst [vmem:[#allocation3] sm:$0xff] %v617
    %s619 = scalar_lea.vmem [#allocation2], 40
    %v620 = vld [vmem:[%s619] sm:$0xff]
    %v621 = vld [vmem:[#allocation3] sm:$0xff]
    %622 = vmatprep.subr.mxu0 0.0
    %623 = vmatpush1.msra.mxu0 %v224
    %624 = vmatprep.subr.mxu0 0.0
    %625 = vmatpush1.msra.mxu0 %v225
    %626 = vmatprep.subr.mxu0 0.0
    %627 = vmatpush1.msra.mxu0 %v226
    %628 = vmatprep.subr.mxu0 0.0
    %629 = vmatpush1.msra.mxu0 %v227
    %630 = vmatprep.subr.mxu0 0.0
    %631 = vmatpush1.msra.mxu0 %v228
    %632 = vmatprep.subr.mxu0 0.0
    %633 = vmatpush1.msra.mxu0 %v229
    %634 = vmatprep.subr.mxu0 0.0
    %635 = vmatpush1.msra.mxu0 %v230
    %636 = vmatprep.subr.mxu0 0.0
    %637 = vmatpush1.msra.mxu0 %v231
    %638 = vmatprep.subr.mxu0 0.0
    %639 = vmatpush1.msra.mxu0 %v232
    %640 = vmatprep.subr.mxu0 0.0
    %641 = vmatpush1.msra.mxu0 %v233
    %642 = vmatprep.subr.mxu0 0.0
    %643 = vmatpush1.msra.mxu0 %v234
    %644 = vmatprep.subr.mxu0 0.0
    %645 = vmatpush1.msra.mxu0 %v235
    %646 = vmatprep.subr.mxu0 0.0
    %647 = vmatpush1.msra.mxu0 %v236
    %648 = vmatprep.subr.mxu0 0.0
    %649 = vmatpush1.msra.mxu0 %v237
    %650 = vmatprep.subr.mxu0 0.0
    %651 = vmatpush1.msra.mxu0 %v238
    %652 = vmatprep.subr.mxu0 0.0
    %653 = vmatpush1.msra.mxu0 %v239
    %654 = vmatprep.subr.mxu0 0.0
    %655 = vmatpush1.msra.mxu0 0.0
    %656 = vmatprep.subr.mxu0 0.0
    %657 = vmatpush1.msra.mxu0 0.0
    %658 = vmatprep.subr.mxu0 0.0
    %659 = vmatpush1.msra.mxu0 0.0
    %660 = vmatprep.subr.mxu0 0.0
    %661 = vmatpush1.msra.mxu0 0.0
    %662 = vmatprep.subr.mxu0 0.0
    %663 = vmatpush1.msra.mxu0 0.0
    %664 = vmatprep.subr.mxu0 0.0
    %665 = vmatpush1.msra.mxu0 0.0
    %666 = vmatprep.subr.mxu0 0.0
    %667 = vmatpush1.msra.mxu0 0.0
    %668 = vmatprep.subr.mxu0 0.0
    %669 = vmatpush1.msra.mxu0 0.0
    %670 = vmatprep.subr.mxu0 0.0
    %671 = vmatpush1.msra.mxu0 0.0
    %672 = vmatprep.subr.mxu0 0.0
    %673 = vmatpush1.msra.mxu0 0.0
    %674 = vmatprep.subr.mxu0 0.0
    %675 = vmatpush1.msra.mxu0 0.0
    %676 = vmatprep.subr.mxu0 0.0
    %677 = vmatpush1.msra.mxu0 0.0
    %678 = vmatprep.subr.mxu0 0.0
    %679 = vmatpush1.msra.mxu0 0.0
    %680 = vmatprep.subr.mxu0 0.0
    %681 = vmatpush1.msra.mxu0 0.0
    %682 = vmatprep.subr.mxu0 0.0
    %683 = vmatpush1.msra.mxu0 0.0
    %684 = vmatprep.subr.mxu0 0.0
    %685 = vmatpush1.msra.mxu0 0.0
    %686 = vmatprep.mubr.f32.mxu0 0.0
    %687 = vmatmul.mubr.f32.gmra.mrb[0].mxu0 %v621
    %v688 = vpop.f32.mrb[0].mxu0
    %v689 = vadd.f32 0.0, %v688
    %v690 = vpop.f32.mrb[0].mxu0
    %691 = vdwg.mxu0
    %v692 = vadd.f32 %v620, %v689
    %v693 = vtanh.pop %v692
    %694 = vst [vmem:[#allocation3] sm:$0xff] %v693
    %s695 = scalar_lea.vmem [#allocation2], 48
    %v696 = vld [vmem:[%s695] sm:$0xff]
    %v697 = vld [vmem:[#allocation3] sm:$0xff]
    %698 = vmatprep.subr.mxu0 0.0
    %699 = vmatpush1.msra.mxu0 %v224
    %700 = vmatprep.subr.mxu0 0.0
    %701 = vmatpush1.msra.mxu0 %v225
    %702 = vmatprep.subr.mxu0 0.0
    %703 = vmatpush1.msra.mxu0 %v226
    %704 = vmatprep.subr.mxu0 0.0
    %705 = vmatpush1.msra.mxu0 %v227
    %706 = vmatprep.subr.mxu0 0.0
    %707 = vmatpush1.msra.mxu0 %v228
    %708 = vmatprep.subr.mxu0 0.0
    %709 = vmatpush1.msra.mxu0 %v229
    %710 = vmatprep.subr.mxu0 0.0
    %711 = vmatpush1.msra.mxu0 %v230
    %712 = vmatprep.subr.mxu0 0.0
    %713 = vmatpush1.msra.mxu0 %v231
    %714 = vmatprep.subr.mxu0 0.0
    %715 = vmatpush1.msra.mxu0 %v232
    %716 = vmatprep.subr.mxu0 0.0
    %717 = vmatpush1.msra.mxu0 %v233
    %718 = vmatprep.subr.mxu0 0.0
    %719 = vmatpush1.msra.mxu0 %v234
    %720 = vmatprep.subr.mxu0 0.0
    %721 = vmatpush1.msra.mxu0 %v235
    %722 = vmatprep.subr.mxu0 0.0
    %723 = vmatpush1.msra.mxu0 %v236
    %724 = vmatprep.subr.mxu0 0.0
    %725 = vmatpush1.msra.mxu0 %v237
    %726 = vmatprep.subr.mxu0 0.0
    %727 = vmatpush1.msra.mxu0 %v238
    %728 = vmatprep.subr.mxu0 0.0
    %729 = vmatpush1.msra.mxu0 %v239
    %730 = vmatprep.subr.mxu0 0.0
    %731 = vmatpush1.msra.mxu0 0.0
    %732 = vmatprep.subr.mxu0 0.0
    %733 = vmatpush1.msra.mxu0 0.0
    %734 = vmatprep.subr.mxu0 0.0
    %735 = vmatpush1.msra.mxu0 0.0
    %736 = vmatprep.subr.mxu0 0.0
    %737 = vmatpush1.msra.mxu0 0.0
    %738 = vmatprep.subr.mxu0 0.0
    %739 = vmatpush1.msra.mxu0 0.0
    %740 = vmatprep.subr.mxu0 0.0
    %741 = vmatpush1.msra.mxu0 0.0
    %742 = vmatprep.subr.mxu0 0.0
    %743 = vmatpush1.msra.mxu0 0.0
    %744 = vmatprep.subr.mxu0 0.0
    %745 = vmatpush1.msra.mxu0 0.0
    %746 = vmatprep.subr.mxu0 0.0
    %747 = vmatpush1.msra.mxu0 0.0
    %748 = vmatprep.subr.mxu0 0.0
    %749 = vmatpush1.msra.mxu0 0.0
    %750 = vmatprep.subr.mxu0 0.0
    %751 = vmatpush1.msra.mxu0 0.0
    %752 = vmatprep.subr.mxu0 0.0
    %753 = vmatpush1.msra.mxu0 0.0
    %754 = vmatprep.subr.mxu0 0.0
    %755 = vmatpush1.msra.mxu0 0.0
    %756 = vmatprep.subr.mxu0 0.0
    %757 = vmatpush1.msra.mxu0 0.0
    %758 = vmatprep.subr.mxu0 0.0
    %759 = vmatpush1.msra.mxu0 0.0
    %760 = vmatprep.subr.mxu0 0.0
    %761 = vmatpush1.msra.mxu0 0.0
    %762 = vmatprep.mubr.f32.mxu0 0.0
    %763 = vmatmul.mubr.f32.gmra.mrb[0].mxu0 %v697
    %v764 = vpop.f32.mrb[0].mxu0
    %v765 = vadd.f32 0.0, %v764
    %v766 = vpop.f32.mrb[0].mxu0
    %767 = vdwg.mxu0
    %v768 = vadd.f32 %v696, %v765
    %v769 = vtanh.pop %v768
    %770 = vst [vmem:[#allocation3] sm:$0xff] %v769
    %s771 = scalar_lea.vmem [#allocation2], 56
    %v772 = vld [vmem:[%s771] sm:$0xff]
    %v773 = vld [vmem:[#allocation3] sm:$0xff]
    %774 = vmatprep.subr.mxu0 0.0
    %775 = vmatpush1.msra.mxu0 %v224
    %776 = vmatprep.subr.mxu0 0.0
    %777 = vmatpush1.msra.mxu0 %v225
    %778 = vmatprep.subr.mxu0 0.0
    %779 = vmatpush1.msra.mxu0 %v226
    %780 = vmatprep.subr.mxu0 0.0
    %781 = vmatpush1.msra.mxu0 %v227
    %782 = vmatprep.subr.mxu0 0.0
    %783 = vmatpush1.msra.mxu0 %v228
    %784 = vmatprep.subr.mxu0 0.0
    %785 = vmatpush1.msra.mxu0 %v229
    %786 = vmatprep.subr.mxu0 0.0
    %787 = vmatpush1.msra.mxu0 %v230
    %788 = vmatprep.subr.mxu0 0.0
    %789 = vmatpush1.msra.mxu0 %v231
    %790 = vmatprep.subr.mxu0 0.0
    %791 = vmatpush1.msra.mxu0 %v232
    %792 = vmatprep.subr.mxu0 0.0
    %793 = vmatpush1.msra.mxu0 %v233
    %794 = vmatprep.subr.mxu0 0.0
    %795 = vmatpush1.msra.mxu0 %v234
    %796 = vmatprep.subr.mxu0 0.0
    %797 = vmatpush1.msra.mxu0 %v235
    %798 = vmatprep.subr.mxu0 0.0
    %799 = vmatpush1.msra.mxu0 %v236
    %800 = vmatprep.subr.mxu0 0.0
    %801 = vmatpush1.msra.mxu0 %v237
    %802 = vmatprep.subr.mxu0 0.0
    %803 = vmatpush1.msra.mxu0 %v238
    %804 = vmatprep.subr.mxu0 0.0
    %805 = vmatpush1.msra.mxu0 %v239
    %806 = vmatprep.subr.mxu0 0.0
    %807 = vmatpush1.msra.mxu0 0.0
    %808 = vmatprep.subr.mxu0 0.0
    %809 = vmatpush1.msra.mxu0 0.0
    %810 = vmatprep.subr.mxu0 0.0
    %811 = vmatpush1.msra.mxu0 0.0
    %812 = vmatprep.subr.mxu0 0.0
    %813 = vmatpush1.msra.mxu0 0.0
    %814 = vmatprep.subr.mxu0 0.0
    %815 = vmatpush1.msra.mxu0 0.0
    %816 = vmatprep.subr.mxu0 0.0
    %817 = vmatpush1.msra.mxu0 0.0
    %818 = vmatprep.subr.mxu0 0.0
    %819 = vmatpush1.msra.mxu0 0.0
    %820 = vmatprep.subr.mxu0 0.0
    %821 = vmatpush1.msra.mxu0 0.0
    %822 = vmatprep.subr.mxu0 0.0
    %823 = vmatpush1.msra.mxu0 0.0
    %824 = vmatprep.subr.mxu0 0.0
    %825 = vmatpush1.msra.mxu0 0.0
    %826 = vmatprep.subr.mxu0 0.0
    %827 = vmatpush1.msra.mxu0 0.0
    %828 = vmatprep.subr.mxu0 0.0
    %829 = vmatpush1.msra.mxu0 0.0
    %830 = vmatprep.subr.mxu0 0.0
    %831 = vmatpush1.msra.mxu0 0.0
    %832 = vmatprep.subr.mxu0 0.0
    %833 = vmatpush1.msra.mxu0 0.0
    %834 = vmatprep.subr.mxu0 0.0
    %835 = vmatpush1.msra.mxu0 0.0
    %836 = vmatprep.subr.mxu0 0.0
    %837 = vmatpush1.msra.mxu0 0.0
    %838 = vmatprep.mubr.f32.mxu0 0.0
    %839 = vmatmul.mubr.f32.gmra.mrb[0].mxu0 %v773
    %v840 = vpop.f32.mrb[0].mxu0
    %v841 = vadd.f32 0.0, %v840
    %v842 = vpop.f32.mrb[0].mxu0
    %843 = vdwg.mxu0
    %v844 = vadd.f32 %v772, %v841
    %v845 = vtanh.pop %v844
    %846 = vst [vmem:[#allocation3] sm:$0xff] %v845
    %v847 = vld [vmem:[#allocation3] sm:$0xff]
    %v848 = vld [vmem:[#allocation10] sm:$0xff]
    %v849 = vld [vmem:[#allocation10 + $0x8] sm:$0xff]
    %v850 = vld [vmem:[#allocation10 + $0x10] sm:$0xff]
    %v851 = vld [vmem:[#allocation10 + $0x18] sm:$0xff]
    %v852 = vld [vmem:[#allocation10 + $0x20] sm:$0xff]
    %v853 = vld [vmem:[#allocation10 + $0x28] sm:$0xff]
    %v854 = vld [vmem:[#allocation10 + $0x30] sm:$0xff]
    %v855 = vld [vmem:[#allocation10 + $0x38] sm:$0xff]
    %v856 = vld [vmem:[#allocation10 + $0x40] sm:$0xff]
    %v857 = vld [vmem:[#allocation10 + $0x48] sm:$0xff]
    %v858 = vld [vmem:[#allocation10 + $0x50] sm:$0xff]
    %v859 = vld [vmem:[#allocation10 + $0x58] sm:$0xff]
    %v860 = vld [vmem:[#allocation10 + $0x60] sm:$0xff]
    %v861 = vld [vmem:[#allocation10 + $0x68] sm:$0xff]
    %v862 = vld [vmem:[#allocation10 + $0x70] sm:$0xff]
    %v863 = vld [vmem:[#allocation10 + $0x78] sm:$0xff]
    %v864 = vld [vmem:[%s5] sm:$0x1]
    %v866 = vlaneseq
    %v867 = vshrl.u32 %v866, 7
    %v868 = vsub.s32 0, %v867
    %v869 = vrot.slane %v864, %v868
    %871 = vmatprep.subr.mxu0 0.0
    %872 = vmatpush1.msra.mxu0 %v848
    %873 = vmatprep.subr.mxu0 0.0
    %874 = vmatpush1.msra.mxu0 %v849
    %875 = vmatprep.subr.mxu0 0.0
    %876 = vmatpush1.msra.mxu0 %v850
    %877 = vmatprep.subr.mxu0 0.0
    %878 = vmatpush1.msra.mxu0 %v851
    %879 = vmatprep.subr.mxu0 0.0
    %880 = vmatpush1.msra.mxu0 %v852
    %881 = vmatprep.subr.mxu0 0.0
    %882 = vmatpush1.msra.mxu0 %v853
    %883 = vmatprep.subr.mxu0 0.0
    %884 = vmatpush1.msra.mxu0 %v854
    %885 = vmatprep.subr.mxu0 0.0
    %886 = vmatpush1.msra.mxu0 %v855
    %887 = vmatprep.subr.mxu0 0.0
    %888 = vmatpush1.msra.mxu0 %v856
    %889 = vmatprep.subr.mxu0 0.0
    %890 = vmatpush1.msra.mxu0 %v857
    %891 = vmatprep.subr.mxu0 0.0
    %892 = vmatpush1.msra.mxu0 %v858
    %893 = vmatprep.subr.mxu0 0.0
    %894 = vmatpush1.msra.mxu0 %v859
    %895 = vmatprep.subr.mxu0 0.0
    %896 = vmatpush1.msra.mxu0 %v860
    %897 = vmatprep.subr.mxu0 0.0
    %898 = vmatpush1.msra.mxu0 %v861
    %899 = vmatprep.subr.mxu0 0.0
    %900 = vmatpush1.msra.mxu0 %v862
    %901 = vmatprep.subr.mxu0 0.0
    %902 = vmatpush1.msra.mxu0 %v863
    %903 = vmatprep.subr.mxu0 0.0
    %904 = vmatpush1.msra.mxu0 0.0
    %905 = vmatprep.subr.mxu0 0.0
    %906 = vmatpush1.msra.mxu0 0.0
    %907 = vmatprep.subr.mxu0 0.0
    %908 = vmatpush1.msra.mxu0 0.0
    %909 = vmatprep.subr.mxu0 0.0
    %910 = vmatpush1.msra.mxu0 0.0
    %911 = vmatprep.subr.mxu0 0.0
    %912 = vmatpush1.msra.mxu0 0.0
    %913 = vmatprep.subr.mxu0 0.0
    %914 = vmatpush1.msra.mxu0 0.0
    %915 = vmatprep.subr.mxu0 0.0
    %916 = vmatpush1.msra.mxu0 0.0
    %917 = vmatprep.subr.mxu0 0.0
    %918 = vmatpush1.msra.mxu0 0.0
    %919 = vmatprep.subr.mxu0 0.0
    %920 = vmatpush1.msra.mxu0 0.0
    %921 = vmatprep.subr.mxu0 0.0
    %922 = vmatpush1.msra.mxu0 0.0
    %923 = vmatprep.subr.mxu0 0.0
    %924 = vmatpush1.msra.mxu0 0.0
    %925 = vmatprep.subr.mxu0 0.0
    %926 = vmatpush1.msra.mxu0 0.0
    %927 = vmatprep.subr.mxu0 0.0
    %928 = vmatpush1.msra.mxu0 0.0
    %929 = vmatprep.subr.mxu0 0.0
    %930 = vmatpush1.msra.mxu0 0.0
    %931 = vmatprep.subr.mxu0 0.0
    %932 = vmatpush1.msra.mxu0 0.0
    %933 = vmatprep.subr.mxu0 0.0
    %934 = vmatpush1.msra.mxu0 0.0
    %935 = vmatprep.mubr.f32.mxu0 0.0
    %936 = vmatmul.mubr.f32.gmra.mrb[0].mxu0 %v847
    %v937 = vpop.f32.mrb[0].mxu0
    %v938 = vadd.f32 %v869, %v937
    %v939 = vpop.f32.mrb[0].mxu0
    %940 = vdwg.mxu0
    %941 = vst [vmem:[#allocation12] sm:$0xff] %v938
    // Predicated region
    $region42: #{tpu_custom_call.1} parent=1 // pred_check
      _
    $region43: #{tpu_custom_call.1} parent=1 // pred_check_branch
      %943 = sbr.rel (0) target = $region45
    $region44: #{tpu_custom_call.1} parent=1 // pred_region
      %s945 = ssub.s32 128, 128
      %946 = vsyncadd [#allocation6], %s945
      %s948 = sshll.u32 [#allocation12], 4
      %s949 = int_to_ptr.vmem [resolvable:$true] %s948
      %951 = dma.vmem_to_hbm [thread:$0]  %s949, 128, %s6, [#allocation6]
    $region45: #{tpu_custom_call.1} parent=1 // pred_fallthru
      _
    // Predicated region
    $region46: #{tpu_custom_call.1} parent=1 // pred_check
      _
    $region47: #{tpu_custom_call.1} parent=1 // pred_check_branch
      %953 = sbr.rel (0) target = $region49
    $region48: #{tpu_custom_call.1} parent=1 // pred_region
      %954 = dma.done [#allocation6], 128
    $region49: #{tpu_custom_call.1} parent=1 // pred_fallthru
      _
    %955 = vsyncpa [#allocation5], 1
    %956 = vsyncpa [#allocation8], 1
    %957 = vsyncpa [#allocation11], 1
    %958 = vsyncpa [#allocation6], 1

</llo_original>
